<compile_context>
chip_gen: v7x
topology: tpu7x:2x2x1
jax: 0.10.0
libtpu: 0.0.40
codegen_flags: <defaults>
</compile_context>

<pallas_src>
import jax
import jax.numpy as jnp
from jax.experimental import pallas as pl
from jax.experimental.pallas import tpu as pltpu

FEATURES = 13
_SUBLANE = 16          # legal sublane multiple for both f32 (8) and bf16 (16)
_MAX_TB = 16 * 1024    # VMEM-safe batch tile (see header comment)


def _round_up(x, m):
    return ((x + m - 1) // m) * m


def _choose_batch_tile(batch, max_tb):
    """Balanced, sublane-aligned batch tile + tile count.

    - Small batches: one full-array block (grid-step overhead would dominate
      any split, and a full-dims block is always a legal BlockSpec).
    - Large batches: >= 4 balanced tiles (>= 2 per v7x TensorCore), each a
      multiple of 16 rows and capped at `max_tb` rows for VMEM.  The edge
      block is clipped by Pallas, so total padding is < 16 rows.
    """
    if batch <= 1024:
        return batch, 1
    num_tiles = max(4, pl.cdiv(batch, max_tb))
    tb = _round_up(pl.cdiv(batch, num_tiles), _SUBLANE)
    num_tiles = pl.cdiv(batch, tb)
    return tb, num_tiles


def _logreg_kernel(x_ref, w_ref, b_ref, o_ref):
    # (TB, 13) batch-major block; upcast is a no-op for f32, free-ish for bf16.
    x = x_ref[...].astype(jnp.float32)
    w = w_ref[...]                                   # (13, 1) f32, grid-resident
    # Tiny-K GEMV on the MXU: fused multiply + lane-reduce on the extended
    # slots, leaving VPU/XLU free in this memory-bound kernel.
    z = jnp.dot(x, w, preferred_element_type=jnp.float32)   # (TB, 1)
    z = z + b_ref[0]                                 # scalar bias from SMEM
    # sigmoid(z) = 0.5 * (tanh(z/2) + 1): one EUP push per vreg instead of two
    # (exp + reciprocal), so the EUP cannot bind before the DMA on v7x.
    o_ref[...] = (0.5 * (jnp.tanh(0.5 * z) + 1.0)).astype(o_ref.dtype)


def logistic_regression(x, weight, bias, *, max_batch_tile=_MAX_TB):
    """PyTorch-equivalent forward: sigmoid(x @ weight.T + bias) -> (B, 1).

    x: (B, 13) float32 (or bfloat16 for half the HBM read); weight: (1, 13)
    (torch.nn.Linear layout); bias: (1,).
    """
    batch, feat = x.shape
    assert feat == FEATURES

    tb, num_tiles = _choose_batch_tile(batch, max_batch_tile)

    w_col = jnp.asarray(weight, jnp.float32).reshape(FEATURES, 1)
    b_vec = jnp.asarray(bias, jnp.float32).reshape(1)

    out = pl.pallas_call(
        _logreg_kernel,
        out_shape=jax.ShapeDtypeStruct((batch, 1), jnp.float32),
        grid_spec=pltpu.PrefetchScalarGridSpec(
            num_scalar_prefetch=0,
            grid=(num_tiles,),
            in_specs=[
                pl.BlockSpec((tb, FEATURES), lambda i: (i, 0)),       # x tile
                pl.BlockSpec((FEATURES, 1), lambda i: (0, 0)),        # weights
                pl.BlockSpec(memory_space=pltpu.MemorySpace.SMEM),    # bias
            ],
            out_specs=pl.BlockSpec((tb, 1), lambda i: (i, 0)),
        ),
        compiler_params=pltpu.CompilerParams(
            dimension_semantics=("parallel",),   # shard batch tiles across TCs
            vmem_limit_bytes=48 * 1024 * 1024,   # >= working set; < v7x 64 MiB
        ),
    )(x, w_col, b_vec)
    return out


if __name__ == "__main__":
    key = jax.random.PRNGKey(0)
    kx, kw, kb = jax.random.split(key, 3)

    B, F = 8, FEATURES
    x = jax.random.normal(kx, (B, F), dtype=jnp.float32)

    # Deterministic parameter init mimicking torch.nn.Linear(13, 1):
    # weight (1, 13), bias (1,), uniform in [-1/sqrt(13), 1/sqrt(13)].
    bound = 1.0 / jnp.sqrt(jnp.float32(F))
    weight = jax.random.uniform(kw, (1, F), minval=-bound, maxval=bound,
                                dtype=jnp.float32)
    bias = jax.random.uniform(kb, (1,), minval=-bound, maxval=bound,
                              dtype=jnp.float32)

    out = jax.block_until_ready(logistic_regression(x, weight, bias))

    # Reference check in plain JAX.
    ref = jax.nn.sigmoid(x @ weight.T + bias)
    assert out.shape == (B, 1)
    assert jnp.allclose(out, ref, atol=1e-5, rtol=1e-5)

    print("KERNEL_OK")
</pallas_src>

<mosaic_0001>
module attributes {stable_mosaic.version = 11 : i64} {
  func.func @_logreg_kernel(%arg0: i32, %arg1: memref<8x13xf32, #tpu.memory_space<vmem>>, %arg2: memref<13x1xf32, #tpu.memory_space<vmem>>, %arg3: memref<1xf32, #tpu.memory_space<smem>>, %arg4: memref<8x1xf32, #tpu.memory_space<vmem>>) attributes {dimension_semantics = [#tpu.dimension_semantics<parallel>], iteration_bounds = array<i64: 1>, scalar_prefetch = 0 : i64, scratch_operands = 0 : i64, tpu.core_type = #tpu.core_type<tc>, window_params = [{transform_indices = @transform_0, window_bounds = array<i64: 8, 13>}, {pipeline_mode = #tpu.pipeline_mode<synchronous>, transform_indices = @transform_1, window_bounds = array<i64: 13, 1>}, {transform_indices = @transform_2, window_bounds = array<i64: 1>}, {transform_indices = @transform_3, window_bounds = array<i64: 8, 1>}]} {
    %c0 = arith.constant 0 : index
    %c0_0 = arith.constant 0 : index
    %0 = vector.load %arg1[%c0, %c0_0] : memref<8x13xf32, #tpu.memory_space<vmem>>, vector<8x13xf32>
    %c0_1 = arith.constant 0 : index
    %c0_2 = arith.constant 0 : index
    %1 = vector.load %arg2[%c0_1, %c0_2] : memref<13x1xf32, #tpu.memory_space<vmem>>, vector<13x1xf32>
    %cst = arith.constant dense<0.000000e+00> : vector<8x1xf32>
    %2 = tpu.matmul %0, %1, %cst {dimension_numbers = #tpu.dot_dimension_numbers<[1], [0], [0], [1], [0, 0, 1, 1], [], []>} : vector<8x13xf32>, vector<13x1xf32>, vector<8x1xf32> -> vector<8x1xf32>
    %c0_3 = arith.constant 0 : index
    %3 = memref.load %arg3[%c0_3] : memref<1xf32, #tpu.memory_space<smem>>
    %4 = vector.broadcast %3 : f32 to vector<8x1xf32>
    %5 = arith.addf %2, %4 : vector<8x1xf32>
    %cst_4 = arith.constant 5.000000e-01 : f32
    %6 = vector.broadcast %cst_4 : f32 to vector<8x1xf32>
    %7 = arith.mulf %6, %5 : vector<8x1xf32>
    %8 = math.tanh %7 : vector<8x1xf32>
    %cst_5 = arith.constant 1.000000e+00 : f32
    %9 = vector.broadcast %cst_5 : f32 to vector<8x1xf32>
    %10 = arith.addf %8, %9 : vector<8x1xf32>
    %cst_6 = arith.constant 5.000000e-01 : f32
    %11 = vector.broadcast %cst_6 : f32 to vector<8x1xf32>
    %12 = arith.mulf %11, %10 : vector<8x1xf32>
    %c0_7 = arith.constant 0 : index
    %c0_8 = arith.constant 0 : index
    %13 = vector.load %arg4[%c0_7, %c0_8] : memref<8x1xf32, #tpu.memory_space<vmem>>, vector<8x1xf32>
    tpu.vector_store %arg4[%c0_7, %c0_8], %12 {strides = array<i32>} : memref<8x1xf32, #tpu.memory_space<vmem>>, vector<8x1xf32>,
    return
  }
  func.func @transform_0(%arg0: i32) -> (i32, i32) {
    %c0_i32 = arith.constant 0 : i32
    %c0_i32_0 = arith.constant 0 : i32
    return %arg0, %c0_i32 : i32, i32
  }
  func.func @transform_1(%arg0: i32) -> (i32, i32) {
    %c0_i32 = arith.constant 0 : i32
    %c0_i32_0 = arith.constant 0 : i32
    %c0_i32_1 = arith.constant 0 : i32
    return %c0_i32, %c0_i32_0 : i32, i32
  }
  func.func @transform_2(%arg0: i32) -> i32 {
    %c0_i32 = arith.constant 0 : i32
    %c0_i32_0 = arith.constant 0 : i32
    return %c0_i32 : i32
  }
  func.func @transform_3(%arg0: i32) -> (i32, i32) {
    %c0_i32 = arith.constant 0 : i32
    %c0_i32_0 = arith.constant 0 : i32
    return %arg0, %c0_i32 : i32, i32
  }
}

</mosaic_0001>

<llo_original>
// kernel: tpu_custom_call.1
$region0: #{tpu_custom_call.1}
  #allocation0 [shape = 'u32[]', space=smem, size = 0x4, offset = 0x4, fixed_abs, tag = 'smem constant byte address 0x4 - core index']
  #allocation1 [shape = 'u32[144,128]{1,0:T(1,128)}', space=vmem, size = 0x12000, scoped, tag = 'internal scratch']
  #allocation2 [shape = 'f32[1]{0:T(128)S(6)}', space=smem, size = 0x200, scoped, tag = 'scoped memory for tpu_custom_call.1']
  %s0 = inlined_call_operand.vmem [shape: f32[8,13], index: 0, kind: input, shape index: {}]
  %s1 = inlined_call_operand.vmem [shape: f32[13,1], index: 1, kind: input, shape index: {}]
  %s2 = inlined_call_operand.<no memory space> [shape: f32[1], index: 2, kind: input, shape index: {}]
  %s3 = inlined_call_operand.vmem [shape: f32[8,1], index: 3, kind: output, shape index: {}]
  %s4 = sld [smem:[#allocation0]]
  $region22: #{tpu_custom_call.1} parent=0
    _
  %s6 = ssub.s32 1, %s4
  %s7 = scalar_select 0, %s6, %s4
  %8 = sst [smem:[#allocation2]] %s2
  // Predicated region
  $region2: #{tpu_custom_call.1} parent=0 // pred_check
    _
  $region3: #{tpu_custom_call.1} parent=0 // pred_check_branch
    %10 = sbr.rel (0) target = $region5
  $region4: #{tpu_custom_call.1} parent=0 // pred_region
    _
  $region5: #{tpu_custom_call.1} parent=0 // pred_fallthru
    _
  // Predicated region
  $region6: #{tpu_custom_call.1} parent=0 // pred_check
    _
  $region7: #{tpu_custom_call.1} parent=0 // pred_check_branch
    %12 = sbr.rel (0) target = $region9
  $region8: #{tpu_custom_call.1} parent=0 // pred_region
    _
  $region9: #{tpu_custom_call.1} parent=0 // pred_fallthru
    _
  // Predicated region
  $region10: #{tpu_custom_call.1} parent=0 // pred_check
    _
  $region11: #{tpu_custom_call.1} parent=0 // pred_check_branch
    %14 = sbr.rel (0) target = $region13
  $region12: #{tpu_custom_call.1} parent=0 // pred_region
    _
  $region13: #{tpu_custom_call.1} parent=0 // pred_fallthru
    _
  %v15 = vld [vmem:[%s0] sm:$0xff]
  %v16 = vld [vmem:[%s1] sm:$0xff]
  %v17 = vld [vmem:[%s1 + $0x8] sm:$0x1f]
  %s18 = sld [smem:[#allocation2]]
  %v19 = vstv %s18
  %vm20 = vcmask 105472
  %v22 = vsel %vm20, %v15, 0
  %vm24 = vcmask 1044480
  %v26 = vsel %vm24, %v17, 0
  %28 = vmatprep.subr.mxu0 0.0
  %29 = vmatpush1.msra.mxu0 %v16
  %30 = vmatprep.subr.mxu0 0.0
  %31 = vmatpush1.msra.mxu0 %v26
  %32 = vmatprep.subr.mxu0 0.0
  %33 = vmatpush1.msra.mxu0 0.0
  %34 = vmatprep.subr.mxu0 0.0
  %35 = vmatpush1.msra.mxu0 0.0
  %36 = vmatprep.subr.mxu0 0.0
  %37 = vmatpush1.msra.mxu0 0.0
  %38 = vmatprep.subr.mxu0 0.0
  %39 = vmatpush1.msra.mxu0 0.0
  %40 = vmatprep.subr.mxu0 0.0
  %41 = vmatpush1.msra.mxu0 0.0
  %42 = vmatprep.subr.mxu0 0.0
  %43 = vmatpush1.msra.mxu0 0.0
  %44 = vmatprep.subr.mxu0 0.0
  %45 = vmatpush1.msra.mxu0 0.0
  %46 = vmatprep.subr.mxu0 0.0
  %47 = vmatpush1.msra.mxu0 0.0
  %48 = vmatprep.subr.mxu0 0.0
  %49 = vmatpush1.msra.mxu0 0.0
  %50 = vmatprep.subr.mxu0 0.0
  %51 = vmatpush1.msra.mxu0 0.0
  %52 = vmatprep.subr.mxu0 0.0
  %53 = vmatpush1.msra.mxu0 0.0
  %54 = vmatprep.subr.mxu0 0.0
  %55 = vmatpush1.msra.mxu0 0.0
  %56 = vmatprep.subr.mxu0 0.0
  %57 = vmatpush1.msra.mxu0 0.0
  %58 = vmatprep.subr.mxu0 0.0
  %59 = vmatpush1.msra.mxu0 0.0
  %60 = vmatprep.subr.mxu0 0.0
  %61 = vmatpush1.msra.mxu0 0.0
  %62 = vmatprep.subr.mxu0 0.0
  %63 = vmatpush1.msra.mxu0 0.0
  %64 = vmatprep.subr.mxu0 0.0
  %65 = vmatpush1.msra.mxu0 0.0
  %66 = vmatprep.subr.mxu0 0.0
  %67 = vmatpush1.msra.mxu0 0.0
  %68 = vmatprep.subr.mxu0 0.0
  %69 = vmatpush1.msra.mxu0 0.0
  %70 = vmatprep.subr.mxu0 0.0
  %71 = vmatpush1.msra.mxu0 0.0
  %72 = vmatprep.subr.mxu0 0.0
  %73 = vmatpush1.msra.mxu0 0.0
  %74 = vmatprep.subr.mxu0 0.0
  %75 = vmatpush1.msra.mxu0 0.0
  %76 = vmatprep.subr.mxu0 0.0
  %77 = vmatpush1.msra.mxu0 0.0
  %78 = vmatprep.subr.mxu0 0.0
  %79 = vmatpush1.msra.mxu0 0.0
  %80 = vmatprep.subr.mxu0 0.0
  %81 = vmatpush1.msra.mxu0 0.0
  %82 = vmatprep.subr.mxu0 0.0
  %83 = vmatpush1.msra.mxu0 0.0
  %84 = vmatprep.subr.mxu0 0.0
  %85 = vmatpush1.msra.mxu0 0.0
  %86 = vmatprep.subr.mxu0 0.0
  %87 = vmatpush1.msra.mxu0 0.0
  %88 = vmatprep.subr.mxu0 0.0
  %89 = vmatpush1.msra.mxu0 0.0
  %90 = vmatprep.subr.mxu0 0.0
  %91 = vmatpush1.msra.mxu0 0.0
  %92 = vmatprep.mubr.f32.mxu0 0.0
  %93 = vmatmul.mubr.f32.gmra.mrb[0].mxu0 %v22
  %v94 = vpop.f32.mrb[0].mxu0
  %v95 = vadd.f32 %v19, %v94
  %v96 = vpop.f32.mrb[0].mxu0
  %97 = vdwg.mxu0
  %v98 = vmul.f32 %v95, 0.5
  %v99 = vtanh.pop %v98
  %v100 = vadd.f32 %v99, 1.0
  %v101 = vmul.f32 %v100, 0.5
  %vm102 = vcmask 7168
  %103 = vst.msk [vmem:[%s3] sm:$0xff] %vm102, %v101
  // Predicated region
  $region14: #{tpu_custom_call.1} parent=0 // pred_check
    _
  $region15: #{tpu_custom_call.1} parent=0 // pred_check_branch
    %105 = sbr.rel (0) target = $region17
  $region16: #{tpu_custom_call.1} parent=0 // pred_region
    _
  $region17: #{tpu_custom_call.1} parent=0 // pred_fallthru
    _
  // Predicated region
  $region18: #{tpu_custom_call.1} parent=0 // pred_check
    _
  $region19: #{tpu_custom_call.1} parent=0 // pred_check_branch
    %107 = sbr.rel (0) target = $region21
  $region20: #{tpu_custom_call.1} parent=0 // pred_region
    _
  $region21: #{tpu_custom_call.1} parent=0 // pred_fallthru
    _

</llo_original>
